<compile_context>
chip_gen: v7x
topology: tpu7x:2x2x1
jax: 0.10.0
libtpu: 0.0.40
codegen_flags: <defaults>
</compile_context>

<pallas_src>
import jax
import jax.numpy as jnp
from jax.experimental import pallas as pl
from jax.experimental.pallas import tpu as pltpu


# --------------------------------- kernel ------------------------------------
def _bias_add_kernel(x_ref, b_ref, o_ref):
    # x_ref: (block_n, L), b_ref: (1, L).  Broadcast add on the VPU.
    o_ref[...] = x_ref[...] + b_ref[...]


# --------------------------------- glue --------------------------------------
def _bias_forward_impl(x, bias):
    N, C, H, W = x.shape
    L = C * H * W

    # Exact torch `repeat(N,1,H,W).reshape(x.shape)` semantics, computed once
    # on the tiny (C,) parameter: per-sample flat map is bias[k % C].
    bias_flat = bias[jnp.arange(L, dtype=jnp.int32) % C].reshape(1, L)

    # Metadata-only reshape to a lane-dense 2-D slab (last dim = C*H*W).
    x2 = x.reshape(N, L)

    # Whole batch per grid step when small (fills sublanes, amortizes the
    # ~0.35us per-step cost); chunks of 8 rows otherwise so the block shape
    # stays (8,128)-legal and the batch axis can shard across TensorCores.
    block_n = N if N <= 8 else 8
    grid = (pl.cdiv(N, block_n),)

    out2 = pl.pallas_call(
        _bias_add_kernel,
        out_shape=jax.ShapeDtypeStruct((N, L), x.dtype),
        grid=grid,
        in_specs=[
            pl.BlockSpec((block_n, L), lambda i: (i, 0)),  # x rows for this step
            pl.BlockSpec((1, L), lambda i: (0, 0)),        # shared bias row
        ],
        out_specs=pl.BlockSpec((block_n, L), lambda i: (i, 0)),
        compiler_params=pltpu.CompilerParams(dimension_semantics=("parallel",)),
    )(x2, bias_flat)

    # Metadata-only reshape back to NCHW.
    return out2.reshape(N, C, H, W)


bias_forward = jax.jit(_bias_forward_impl)


# --------------------------------- main ---------------------------------------
if __name__ == "__main__":
    N, C, H, W = 2, 4, 16, 16

    key = jax.random.PRNGKey(0)
    kx, kb = jax.random.split(key)
    x = jax.random.normal(kx, (N, C, H, W), jnp.float32)
    # The torch module initializes bias to zeros; use a nonzero bias here so
    # the add is actually exercised and checked.
    bias = jax.random.normal(kb, (C,), jnp.float32)

    out = jax.block_until_ready(bias_forward(x, bias))

    # Pure-JAX reference with the exact torch repeat/reshape semantics:
    # torch: bias.repeat(N,1,H,W) on a 1-D (C,) tensor -> (N,1,H,W*C), then
    # .reshape(x.shape).  jnp.tile reproduces this exactly.
    ref_bias = jnp.tile(bias, (N, 1, H, W)).reshape(x.shape)
    ref = x + ref_bias

    assert out.shape == (N, C, H, W), out.shape
    assert bool(jnp.all(jnp.isfinite(out)))
    assert bool(jnp.allclose(out, ref, atol=1e-6, rtol=1e-6)), float(
        jnp.max(jnp.abs(out - ref))
    )
    print("KERNEL_OK")
</pallas_src>

<mosaic_0001>
module attributes {stable_mosaic.version = 11 : i64} {
  func.func @_bias_add_kernel(%arg0: i32, %arg1: memref<2x1024xf32, #tpu.memory_space<vmem>>, %arg2: memref<1x1024xf32, #tpu.memory_space<vmem>>, %arg3: memref<2x1024xf32, #tpu.memory_space<vmem>>) attributes {dimension_semantics = [#tpu.dimension_semantics<parallel>], iteration_bounds = array<i64: 1>, scalar_prefetch = 0 : i64, scratch_operands = 0 : i64, tpu.core_type = #tpu.core_type<tc>, window_params = [{transform_indices = @transform_0, window_bounds = array<i64: 2, 1024>}, {pipeline_mode = #tpu.pipeline_mode<synchronous>, transform_indices = @transform_1, window_bounds = array<i64: 1, 1024>}, {transform_indices = @transform_2, window_bounds = array<i64: 2, 1024>}]} {
    %c0 = arith.constant 0 : index
    %c0_0 = arith.constant 0 : index
    %0 = vector.load %arg1[%c0, %c0_0] : memref<2x1024xf32, #tpu.memory_space<vmem>>, vector<2x1024xf32>
    %c0_1 = arith.constant 0 : index
    %c0_2 = arith.constant 0 : index
    %1 = vector.load %arg2[%c0_1, %c0_2] : memref<1x1024xf32, #tpu.memory_space<vmem>>, vector<1x1024xf32>
    %2 = vector.broadcast %1 : vector<1x1024xf32> to vector<2x1024xf32>
    %3 = arith.addf %0, %2 : vector<2x1024xf32>
    %c0_3 = arith.constant 0 : index
    %c0_4 = arith.constant 0 : index
    %4 = vector.load %arg3[%c0_3, %c0_4] : memref<2x1024xf32, #tpu.memory_space<vmem>>, vector<2x1024xf32>
    tpu.vector_store %arg3[%c0_3, %c0_4], %3 {strides = array<i32>} : memref<2x1024xf32, #tpu.memory_space<vmem>>, vector<2x1024xf32>,
    return
  }
  func.func @transform_0(%arg0: i32) -> (i32, i32) {
    %c0_i32 = arith.constant 0 : i32
    %c0_i32_0 = arith.constant 0 : i32
    return %arg0, %c0_i32 : i32, i32
  }
  func.func @transform_1(%arg0: i32) -> (i32, i32) {
    %c0_i32 = arith.constant 0 : i32
    %c0_i32_0 = arith.constant 0 : i32
    %c0_i32_1 = arith.constant 0 : i32
    return %c0_i32, %c0_i32_0 : i32, i32
  }
  func.func @transform_2(%arg0: i32) -> (i32, i32) {
    %c0_i32 = arith.constant 0 : i32
    %c0_i32_0 = arith.constant 0 : i32
    return %arg0, %c0_i32 : i32, i32
  }
}

</mosaic_0001>

<llo_original>
// kernel: _bias_forward_impl.1
$region0: #{_bias_forward_impl.1}
  #allocation0 [shape = 'u32[]', space=smem, size = 0x4, offset = 0x4, fixed_abs, tag = 'smem constant byte address 0x4 - core index']
  #allocation1 [shape = 'u32[144,128]{1,0:T(1,128)}', space=vmem, size = 0x12000, scoped, tag = 'internal scratch']
  %s0 = inlined_call_operand.vmem [shape: f32[2,1024], index: 0, kind: input, shape index: {}]
  %s1 = inlined_call_operand.vmem [shape: f32[1,1024], index: 1, kind: input, shape index: {}]
  %s2 = inlined_call_operand.vmem [shape: f32[2,1024], index: 2, kind: output, shape index: {}]
  %s3 = sld [smem:[#allocation0]]
  $region18: #{_bias_forward_impl.1} parent=0
    _
  %s5 = ssub.s32 1, %s3
  %s6 = scalar_select 0, %s5, %s3
  // Predicated region
  $region2: #{_bias_forward_impl.1} parent=0 // pred_check
    _
  $region3: #{_bias_forward_impl.1} parent=0 // pred_check_branch
    %8 = sbr.rel (0) target = $region5
  $region4: #{_bias_forward_impl.1} parent=0 // pred_region
    _
  $region5: #{_bias_forward_impl.1} parent=0 // pred_fallthru
    _
  // Predicated region
  $region6: #{_bias_forward_impl.1} parent=0 // pred_check
    _
  $region7: #{_bias_forward_impl.1} parent=0 // pred_check_branch
    %10 = sbr.rel (0) target = $region9
  $region8: #{_bias_forward_impl.1} parent=0 // pred_region
    _
  $region9: #{_bias_forward_impl.1} parent=0 // pred_fallthru
    _
  %v11 = vld [vmem:[%s0] sm:$0xff]
  %v12 = vld [vmem:[%s0 + $0x8] sm:$0xff]
  %v13 = vld [vmem:[%s1] sm:$0xff]
  %v15 = vlaneseq
  %v16 = vshrl.u32 %v15, 7
  %v17 = vsub.s32 0, %v16
  %v18 = vrot.slane %v13, %v17
  %v19 = vlaneseq
  %v20 = vshrl.u32 %v19, 7
  %v21 = vsub.s32 1, %v20
  %v22 = vrot.slane %v13, %v21
  %v23 = vlaneseq
  %v24 = vshrl.u32 %v23, 7
  %v25 = vsub.s32 2, %v24
  %v26 = vrot.slane %v13, %v25
  %v27 = vlaneseq
  %v28 = vshrl.u32 %v27, 7
  %v29 = vsub.s32 3, %v28
  %v30 = vrot.slane %v13, %v29
  %v31 = vlaneseq
  %v32 = vshrl.u32 %v31, 7
  %v33 = vsub.s32 4, %v32
  %v34 = vrot.slane %v13, %v33
  %v35 = vlaneseq
  %v36 = vshrl.u32 %v35, 7
  %v37 = vsub.s32 5, %v36
  %v38 = vrot.slane %v13, %v37
  %v39 = vlaneseq
  %v40 = vshrl.u32 %v39, 7
  %v41 = vsub.s32 6, %v40
  %v42 = vrot.slane %v13, %v41
  %v43 = vlaneseq
  %v44 = vshrl.u32 %v43, 7
  %v45 = vsub.s32 7, %v44
  %v46 = vrot.slane %v13, %v45
  %v47 = vcombine.low %v18, %v22
  %v48 = vcombine.low %v26, %v30
  %v50 = vunpack.c.l.s4 1983009808
  %v51 = vunpack.c.0.s8 %v50
  %v52 = vlaneseq
  %v53 = vshrl.u32 %v52, 7
  %v54 = vsub.s32 %v51, %v53
  %v55 = vrot.slane %v47, %v54
  %v57 = vunpack.c.l.s4 1983009808
  %v58 = vunpack.c.0.s8 %v57
  %v59 = vlaneseq
  %v60 = vshrl.u32 %v59, 7
  %v61 = vsub.s32 %v58, %v60
  %v62 = vrot.slane %v48, %v61
  %v63 = vcombine.low %v55, %v62
  %v64 = vcombine.low %v34, %v38
  %v65 = vcombine.low %v42, %v46
  %v67 = vunpack.c.l.s4 1983009808
  %v68 = vunpack.c.0.s8 %v67
  %v69 = vlaneseq
  %v70 = vshrl.u32 %v69, 7
  %v71 = vsub.s32 %v68, %v70
  %v72 = vrot.slane %v64, %v71
  %v74 = vunpack.c.l.s4 1983009808
  %v75 = vunpack.c.0.s8 %v74
  %v76 = vlaneseq
  %v77 = vshrl.u32 %v76, 7
  %v78 = vsub.s32 %v75, %v77
  %v79 = vrot.slane %v65, %v78
  %v80 = vcombine.low %v72, %v79
  %v83 = vadd.f32 %v11, %v63
  %v84 = vadd.f32 %v12, %v80
  %85 = vst [vmem:[%s2] sm:$0xff] %v83
  %86 = vst [vmem:[%s2 + $0x8] sm:$0xff] %v84
  // Predicated region
  $region10: #{_bias_forward_impl.1} parent=0 // pred_check
    _
  $region11: #{_bias_forward_impl.1} parent=0 // pred_check_branch
    %88 = sbr.rel (0) target = $region13
  $region12: #{_bias_forward_impl.1} parent=0 // pred_region
    _
  $region13: #{_bias_forward_impl.1} parent=0 // pred_fallthru
    _
  // Predicated region
  $region14: #{_bias_forward_impl.1} parent=0 // pred_check
    _
  $region15: #{_bias_forward_impl.1} parent=0 // pred_check_branch
    %90 = sbr.rel (0) target = $region17
  $region16: #{_bias_forward_impl.1} parent=0 // pred_region
    _
  $region17: #{_bias_forward_impl.1} parent=0 // pred_fallthru
    _

</llo_original>
